<compile_context>
chip_gen: v7x
topology: tpu7x:2x2x1
jax: 0.10.0
libtpu: 0.0.40
codegen_flags: <defaults>
</compile_context>

<pallas_src>
import math

import jax
import jax.numpy as jnp
from jax.experimental import pallas as pl
from jax.experimental.pallas import tpu as pltpu


_EPS = 1e-12  # F.normalize default eps


# ---------------------------------------------------------------------------
# Precompute kernel: per-row inverse L2 norm  (1 / max(||row||_2, eps))
# ---------------------------------------------------------------------------
def _row_inv_norm_kernel(x_ref, o_ref):
    """x_ref: (tr, D) -> o_ref: (tr, 1)."""
    x = x_ref[...].astype(jnp.float32)
    ssq = jnp.sum(x * x, axis=-1, keepdims=True)
    # max(||x||, eps) == sqrt(max(ssq, eps^2)); rsqrt runs on the EUP slot.
    o_ref[...] = jax.lax.rsqrt(jnp.maximum(ssq, _EPS * _EPS))


def _row_inv_norms(x: jax.Array, *, block_rows: int = 512) -> jax.Array:
    """Per-row inverse L2 norm of a (R, D) array, returned as (R, 1) float32."""
    R, D = x.shape
    tr = R if R <= block_rows else block_rows
    return pl.pallas_call(
        _row_inv_norm_kernel,
        out_shape=jax.ShapeDtypeStruct((R, 1), jnp.float32),
        grid=(pl.cdiv(R, tr),),
        in_specs=[pl.BlockSpec((tr, D), lambda r: (r, 0))],
        out_specs=pl.BlockSpec((tr, 1), lambda r: (r, 0)),
        compiler_params=pltpu.CompilerParams(dimension_semantics=("parallel",)),
    )(x)


# ---------------------------------------------------------------------------
# Main kernel: raw matmul on the MXU + output-tile scaling by inverse norms
# ---------------------------------------------------------------------------
def _cosine_matmul_kernel(f_ref, w_ref, finv_ref, winv_ref, o_ref):
    """f: (tm, D), w: (D, tn), finv: (tm, 1), winv: (1, tn), o: (tm, tn)."""
    acc = jnp.dot(f_ref[...], w_ref[...], preferred_element_type=jnp.float32)
    # Normalize by scaling the output tile: mathematically identical to
    # normalizing the operands, but O(tm*tn) work instead of O((tm+tn)*D)
    # per grid step, and no re-normalization of the streamed weight tiles.
    o_ref[...] = (acc * finv_ref[...] * winv_ref[...]).astype(o_ref.dtype)


def arc_margin_product(
    features: jax.Array,
    weight: jax.Array,
    *,
    compute_dtype=jnp.bfloat16,
    block_b: int = 256,
    block_c: int = 1024,
) -> jax.Array:
    """features: (B, in_features), weight: (out_features, in_features) -> (B, out_features)."""
    B, D = features.shape
    C, D_w = weight.shape
    assert D == D_w, "feature dim mismatch"

    # Per-row inverse norms, computed once (f32) from the original operands.
    f_inv = _row_inv_norms(features)                 # (B, 1) f32
    w_inv = _row_inv_norms(weight).reshape(1, C)     # (1, C) f32

    # One-time layout prep (in a real model the weight would be stored this
    # way): pre-transpose to (D, C) so the MXU RHS is layout-native and the
    # output lane axis (classes) is contiguous in HBM; cast both operands to
    # the MXU-native compute dtype to halve the streamed bytes.
    w_dc = weight.T.astype(compute_dtype)            # (D, C)
    f_cd = features.astype(compute_dtype)            # (B, D)

    tm = B if B <= block_b else block_b
    tn = C if C <= block_c else block_c
    grid = (pl.cdiv(B, tm), pl.cdiv(C, tn))

    return pl.pallas_call(
        _cosine_matmul_kernel,
        out_shape=jax.ShapeDtypeStruct((B, C), jnp.float32),
        grid=grid,
        in_specs=[
            pl.BlockSpec((tm, D), lambda i, j: (i, 0)),   # feature tile
            pl.BlockSpec((D, tn), lambda i, j: (0, j)),   # weight (D, C) stream
            pl.BlockSpec((tm, 1), lambda i, j: (i, 0)),   # 1/||f_row||
            pl.BlockSpec((1, tn), lambda i, j: (0, j)),   # 1/||w_row||
        ],
        out_specs=pl.BlockSpec((tm, tn), lambda i, j: (i, j)),
        compiler_params=pltpu.CompilerParams(
            dimension_semantics=("parallel", "parallel"),
        ),
    )(f_cd, w_dc, f_inv, w_inv)


# ---------------------------------------------------------------------------
# Parameter init + pure-JAX reference (matching the PyTorch module)
# ---------------------------------------------------------------------------
def init_arc_margin_weight(key, in_features: int, out_features: int) -> jax.Array:
    """ArcMarginProduct.reset_parameters: uniform(-stdv, stdv), stdv = 1/sqrt(in_features)."""
    stdv = 1.0 / math.sqrt(in_features)
    return jax.random.uniform(
        key, (out_features, in_features), dtype=jnp.float32, minval=-stdv, maxval=stdv
    )


def arc_margin_reference(features, weight):
    f_n = features / jnp.maximum(
        jnp.linalg.norm(features, axis=-1, keepdims=True), _EPS
    )
    w_n = weight / jnp.maximum(jnp.linalg.norm(weight, axis=-1, keepdims=True), _EPS)
    return f_n @ w_n.T


if __name__ == "__main__":
    key = jax.random.PRNGKey(0)
    k1, k2, k3, k4 = jax.random.split(key, 4)

    # Test 1: small shapes consistent with the module (single-block grid),
    # default bf16 MXU path.
    B, D, C = 8, 32, 16
    feats = jax.random.normal(k1, (B, D), dtype=jnp.float32)
    w = init_arc_margin_weight(k2, D, C)

    cosine = arc_margin_product(feats, w)
    jax.block_until_ready(cosine)

    ref = arc_margin_reference(feats, w)
    assert cosine.shape == (B, C)
    assert jnp.allclose(cosine, ref, atol=2e-2), "bf16 path mismatch vs reference"

    # Test 2: exercise the tiled grid (2 x 3 blocks), f32 compute path.
    B2, D2, C2 = 16, 32, 384
    feats2 = jax.random.normal(k3, (B2, D2), dtype=jnp.float32)
    w2 = init_arc_margin_weight(k4, D2, C2)

    cosine2 = arc_margin_product(
        feats2, w2, compute_dtype=jnp.float32, block_b=8, block_c=128
    )
    jax.block_until_ready(cosine2)

    ref2 = arc_margin_reference(feats2, w2)
    assert cosine2.shape == (B2, C2)
    assert jnp.allclose(cosine2, ref2, atol=5e-3), "f32 path mismatch vs reference"

    print("KERNEL_OK")
</pallas_src>

<mosaic_0001>
module attributes {stable_mosaic.version = 11 : i64} {
  func.func @_row_inv_norm_kernel(%arg0: i32, %arg1: memref<8x32xf32, #tpu.memory_space<vmem>>, %arg2: memref<8x1xf32, #tpu.memory_space<vmem>>) attributes {dimension_semantics = [#tpu.dimension_semantics<parallel>], iteration_bounds = array<i64: 1>, scalar_prefetch = 0 : i64, scratch_operands = 0 : i64, tpu.core_type = #tpu.core_type<tc>, window_params = [{transform_indices = @transform_0, window_bounds = array<i64: 8, 32>}, {transform_indices = @transform_1, window_bounds = array<i64: 8, 1>}]} {
    %c0 = arith.constant 0 : index
    %c0_0 = arith.constant 0 : index
    %0 = vector.load %arg1[%c0, %c0_0] : memref<8x32xf32, #tpu.memory_space<vmem>>, vector<8x32xf32>
    %1 = arith.mulf %0, %0 : vector<8x32xf32>
    %cst = arith.constant dense<0.000000e+00> : vector<8xf32>
    %2 = vector.multi_reduction <add>, %1, %cst [1] : vector<8x32xf32> to vector<8xf32>
    %3 = vector.shape_cast %2 : vector<8xf32> to vector<8x1xf32>
    %cst_1 = arith.constant 1.000000e-24 : f32
    %4 = vector.broadcast %cst_1 : f32 to vector<8x1xf32>
    %5 = arith.maximumf %3, %4 : vector<8x1xf32>
    %6 = math.rsqrt %5 : vector<8x1xf32>
    %c0_2 = arith.constant 0 : index
    %c0_3 = arith.constant 0 : index
    %7 = vector.load %arg2[%c0_2, %c0_3] : memref<8x1xf32, #tpu.memory_space<vmem>>, vector<8x1xf32>
    tpu.vector_store %arg2[%c0_2, %c0_3], %6 {strides = array<i32>} : memref<8x1xf32, #tpu.memory_space<vmem>>, vector<8x1xf32>,
    return
  }
  func.func @transform_0(%arg0: i32) -> (i32, i32) {
    %c0_i32 = arith.constant 0 : i32
    %c0_i32_0 = arith.constant 0 : i32
    return %arg0, %c0_i32 : i32, i32
  }
  func.func @transform_1(%arg0: i32) -> (i32, i32) {
    %c0_i32 = arith.constant 0 : i32
    %c0_i32_0 = arith.constant 0 : i32
    return %arg0, %c0_i32 : i32, i32
  }
}

</mosaic_0001>

<llo_original>
// kernel: tpu_custom_call.1
$region0: #{tpu_custom_call.1}
  #allocation0 [shape = 'u32[]', space=smem, size = 0x4, offset = 0x4, fixed_abs, tag = 'smem constant byte address 0x4 - core index']
  #allocation1 [shape = 'u32[144,128]{1,0:T(1,128)}', space=vmem, size = 0x12000, scoped, tag = 'internal scratch']
  %s0 = inlined_call_operand.hbm [shape: f32[8,32], index: 0, kind: input, shape index: {}]
  %s1 = inlined_call_operand.vmem [shape: f32[8,1], index: 1, kind: output, shape index: {}]
  %s2 = sld [smem:[#allocation0]]
  $region18: #{tpu_custom_call.1} parent=0
    _
  %s4 = ssub.s32 1, %s2
  %s5 = scalar_select 0, %s4, %s2
  $region1: #{tpu_custom_call.1} parent=0
    #allocation2 [shape = 'u8[4096]{0}', space=vmem, size = 0x1000, scoped, tag = 'input window, operand 0, single buffered']
    #allocation3 [shape = 's32[1]{0}', space=sflag, size = 0x4, scoped, tag = 'scoped memory for tpu_custom_call.1']
    %6 = vsyncpa [#allocation3], 0
    // Predicated region
    $region2: #{tpu_custom_call.1} parent=1 // pred_check
      _
    $region3: #{tpu_custom_call.1} parent=1 // pred_check_branch
      %8 = sbr.rel (0) target = $region5
    $region4: #{tpu_custom_call.1} parent=1 // pred_region
      %s10 = ssub.s32 128, 128
      %11 = vsyncadd [#allocation3], %s10
      %s13 = sshll.u32 [#allocation2], 4
      %s14 = int_to_ptr.vmem [resolvable:$true] %s13
      %16 = dma.hbm_to_vmem [thread:$0]  %s0, 128, %s14, [#allocation3]
    $region5: #{tpu_custom_call.1} parent=1 // pred_fallthru
      _
    // Predicated region
    $region6: #{tpu_custom_call.1} parent=1 // pred_check
      _
    $region7: #{tpu_custom_call.1} parent=1 // pred_check_branch
      %18 = sbr.rel (0) target = $region9
    $region8: #{tpu_custom_call.1} parent=1 // pred_region
      %19 = dma.done [#allocation3], 128
    $region9: #{tpu_custom_call.1} parent=1 // pred_fallthru
      _
    %v20 = vld [vmem:[#allocation2] sm:$0xff]
    %v21 = vmul.f32 %v20, %v20
    %vm22 = vcmask 261120
    %v23 = vsel %vm22, %v21, 0.0
    %24 = vadd.xlane.f32.xlu0 %v23
    %v25 = vpop.xlane.xlu0 %24
    %v26 = vmax.f32 %v25, 1e-24
    %v27 = vrsqrt.pop %v26
    %vm28 = vcmask 7168
    %29 = vst.msk [vmem:[%s1] sm:$0xff] %vm28, %v27
    // Predicated region
    $region10: #{tpu_custom_call.1} parent=1 // pred_check
      _
    $region11: #{tpu_custom_call.1} parent=1 // pred_check_branch
      %31 = sbr.rel (0) target = $region13
    $region12: #{tpu_custom_call.1} parent=1 // pred_region
      _
    $region13: #{tpu_custom_call.1} parent=1 // pred_fallthru
      _
    // Predicated region
    $region14: #{tpu_custom_call.1} parent=1 // pred_check
      _
    $region15: #{tpu_custom_call.1} parent=1 // pred_check_branch
      %33 = sbr.rel (0) target = $region17
    $region16: #{tpu_custom_call.1} parent=1 // pred_region
      _
    $region17: #{tpu_custom_call.1} parent=1 // pred_fallthru
      _
    %34 = vsyncpa [#allocation3], 1

</llo_original>
